<compile_context>
chip_gen: v7x
topology: tpu7x:2x2x1
jax: 0.10.0
libtpu: 0.0.40
codegen_flags: <defaults>
</compile_context>

<pallas_src>
import functools

import jax
import jax.numpy as jnp
from jax.experimental import pallas as pl
from jax.experimental.pallas import tpu as pltpu

EPS = 1e-5


def _round_up(x, m):
    return (x + m - 1) // m * m


def _pick_batch_tile(n, per_image_bytes, target_bytes=1 << 20, min_steps=4):
    """Images per grid step: large enough to amortize per-step overhead / DMA
    latency, small enough to keep >= min_steps grid steps (v7x: 2 TensorCores,
    plus pipeline depth) and ~target_bytes of in+out per step."""
    nb = max(1, min(n, target_bytes // max(per_image_bytes, 1)))
    if n >= min_steps:
        nb = min(nb, n // min_steps)
    nb = max(1, nb)
    while n % nb:            # nb must divide n
        nb -= 1
    return nb


# ---------- Kernel 1: BN batch stats -> (scale, shift), single launch ----------
def bn_scale_shift_kernel(x_ref, gamma_ref, beta_ref, o_ref, *, nb, inv_count, eps):
    # x_ref:     [Nb, Cin, HW]   (channels on sublanes, H*W on lanes)
    # gamma_ref: [Cin, 1]
    # beta_ref:  [Cin, 1]
    # o_ref:     [Cin, 2]        accumulator; on the last step rewritten to
    #                            col0 = scale = gamma*rsqrt(var+eps)
    #                            col1 = shift = beta - mean*scale
    @pl.when(pl.program_id(0) == 0)
    def _():
        o_ref[...] = jnp.zeros_like(o_ref)

    cin = x_ref.shape[1]
    s = jnp.zeros((cin, 1), jnp.float32)
    ss = jnp.zeros((cin, 1), jnp.float32)
    for n in range(nb):                              # static unroll, nb small
        xi = x_ref[n].astype(jnp.float32)            # [Cin, HW]
        s = s + jnp.sum(xi, axis=1, keepdims=True)
        ss = ss + jnp.sum(xi * xi, axis=1, keepdims=True)
    o_ref[...] += jnp.concatenate([s, ss], axis=1)   # (sum, sumsq)

    # Finalize in-kernel on the last grid step: no extra launch / XLA op chain.
    @pl.when(pl.program_id(0) == pl.num_programs(0) - 1)
    def _():
        tot = o_ref[...]                             # [Cin, 2]
        mean = tot[:, 0:1] * inv_count
        var = tot[:, 1:2] * inv_count - mean * mean  # biased var (PyTorch BN fwd)
        scale = gamma_ref[...] * jax.lax.rsqrt(var + eps)
        shift = beta_ref[...] - mean * scale
        o_ref[...] = jnp.concatenate([scale, shift], axis=1)


# --------- Kernel 2: fused normalize + ReLU + im2col + 3x3 conv (s=1, p=1) ---------
def fused_bn_relu_conv3x3_kernel(x_ref, ss_ref, mask_ref, w_ref, b_ref, o_ref,
                                 slab_ref, *, H, W, nb, cin_pad, compute_dtype):
    # x_ref:    [Nb, Cin, HW]        raw input
    # ss_ref:   [Cin, 2]             (scale, shift) from the stats kernel
    # mask_ref: [8, HW]              per-image 0/1 border mask for the 8 shifted taps
    # w_ref:    [Cout, 9*cin_pad]    tap-major / channel-minor (padded channels = 0)
    # b_ref:    [Cout, 1]
    # o_ref:    [Nb, Cout, HW]       lane-dense output stores (HW multiple of 128)
    # slab_ref: VMEM [9*cin_pad, Nb*HW] im2col scratch
    cin = x_ref.shape[1]
    hw = H * W

    ss = ss_ref[...]                                 # [Cin, 2]
    scale = ss[:, 0:1]
    shift = ss[:, 1:2]
    masks = mask_ref[...]                            # [8, HW], compute_dtype

    taps = [(dh, dw) for dh in (-1, 0, 1) for dw in (-1, 0, 1)]

    for n in range(nb):                              # static unroll over images
        # BN (affine, precomputed batch stats) + ReLU in fp32 on the VPU, then
        # cast early (bf16 on v6e/v7x halves roll / multiply / slab traffic).
        x = x_ref[n].astype(jnp.float32)             # [Cin, HW]
        y = jnp.maximum(x * scale + shift, 0.0).astype(compute_dtype)
        if cin_pad > cin:                            # pad channels to sublane multiple
            y = jnp.concatenate(
                [y, jnp.zeros((cin_pad - cin, hw), compute_dtype)], axis=0)

        # 9 taps: static XLU lane rolls + one border-mask multiply per tap,
        # written into the VMEM scratch slab at 8-aligned sublane /
        # 128-aligned lane offsets (no live 9-patch concat in vregs).
        mask_row = 0
        for tap, (dh, dw) in enumerate(taps):
            off = dh * W + dw
            if off == 0:
                piece = y
            else:
                piece = pltpu.roll(y, (-off) % hw, 1) * masks[mask_row:mask_row + 1, :]
                mask_row += 1
            slab_ref[pl.ds(tap * cin_pad, cin_pad), pl.ds(n * hw, hw)] = piece

    # Single MXU matmul over the whole batch group: N-dim = Nb*HW, fp32 acc.
    acc = jnp.dot(w_ref[...], slab_ref[...],
                  preferred_element_type=jnp.float32)          # [Cout, Nb*HW]
    acc = acc + b_ref[...]
    for n in range(nb):
        o_ref[n] = acc[:, n * hw:(n + 1) * hw].astype(o_ref.dtype)


# ----------------------------------- Full block forward -----------------------------------
def preact_conv_block(x_nchw, gamma, beta, w_oihw, bias=None, *,
                      compute_dtype=jnp.float32, images_per_step=None):
    """PreActConvBlock forward:
       BatchNorm2d(train-mode batch stats) -> ReLU -> Conv2d(k=3, s=1, p=1)."""
    N, Cin, H, W = x_nchw.shape
    Cout, wc, KH, KW = w_oihw.shape
    assert (KH, KW) == (3, 3) and wc == Cin
    HW = H * W                                   # 256 here -> lane-dense (multiple of 128)

    x3 = x_nchw.reshape(N, Cin, HW)              # free reshape, keeps NCHW order

    if images_per_step is None:
        per_img = (Cin + Cout) * HW * x_nchw.dtype.itemsize
        nb = _pick_batch_tile(N, per_img)
    else:
        nb = images_per_step
    assert N % nb == 0, (N, nb)
    steps = N // nb

    # ---- pass 1: per-channel (scale, shift) in ONE accumulating Pallas launch ----
    ss = pl.pallas_call(
        functools.partial(bn_scale_shift_kernel, nb=nb,
                          inv_count=1.0 / float(N * HW), eps=EPS),
        out_shape=jax.ShapeDtypeStruct((Cin, 2), jnp.float32),
        grid_spec=pltpu.PrefetchScalarGridSpec(
            num_scalar_prefetch=0,
            grid=(steps,),
            in_specs=[
                pl.BlockSpec((nb, Cin, HW), lambda g: (g, 0, 0)),
                pl.BlockSpec((Cin, 1), lambda g: (0, 0)),
                pl.BlockSpec((Cin, 1), lambda g: (0, 0)),
            ],
            out_specs=pl.BlockSpec((Cin, 2), lambda g: (0, 0)),
        ),
        # Output block revisited every step (reduction over the batch grid).
        compiler_params=pltpu.CompilerParams(dimension_semantics=("arbitrary",)),
    )(x3,
      gamma.reshape(Cin, 1).astype(jnp.float32),
      beta.reshape(Cin, 1).astype(jnp.float32))

    # ---- weights: OIHW -> [Cout, 9*cin_pad], tap-major / channel-minor ----
    cin_pad = _round_up(Cin, 8)
    w_t = jnp.transpose(w_oihw, (0, 2, 3, 1))                      # [Cout,KH,KW,Cin]
    w_t = jnp.pad(w_t, ((0, 0), (0, 0), (0, 0), (0, cin_pad - Cin)))
    w_mat = w_t.reshape(Cout, KH * KW * cin_pad).astype(compute_dtype)
    if bias is None:
        bias = jnp.zeros((Cout,), jnp.float32)

    # ---- precomputed per-image border mask (one row per shifted tap) ----
    pos = jnp.arange(HW, dtype=jnp.int32)
    hh, ww = pos // W, pos % W
    rows = []
    for dh in (-1, 0, 1):
        for dw in (-1, 0, 1):
            if dh == 0 and dw == 0:
                continue
            rows.append((hh + dh >= 0) & (hh + dh < H) & (ww + dw >= 0) & (ww + dw < W))
    mask = jnp.stack(rows, axis=0).astype(compute_dtype)           # [8, HW]

    kern = functools.partial(fused_bn_relu_conv3x3_kernel, H=H, W=W, nb=nb,
                             cin_pad=cin_pad, compute_dtype=compute_dtype)
    out3 = pl.pallas_call(
        kern,
        out_shape=jax.ShapeDtypeStruct((N, Cout, HW), x_nchw.dtype),
        grid_spec=pltpu.PrefetchScalarGridSpec(
            num_scalar_prefetch=0,
            grid=(steps,),
            in_specs=[
                pl.BlockSpec((nb, Cin, HW), lambda g: (g, 0, 0)),
                pl.BlockSpec((Cin, 2), lambda g: (0, 0)),
                pl.BlockSpec((8, HW), lambda g: (0, 0)),
                pl.BlockSpec((Cout, KH * KW * cin_pad), lambda g: (0, 0)),
                pl.BlockSpec((Cout, 1), lambda g: (0, 0)),
            ],
            out_specs=pl.BlockSpec((nb, Cout, HW), lambda g: (g, 0, 0)),
            scratch_shapes=[pltpu.VMEM((KH * KW * cin_pad, nb * HW), compute_dtype)],
        ),
        # Batch groups are independent -> "parallel" (v7x 2 TensorCores).
        compiler_params=pltpu.CompilerParams(dimension_semantics=("parallel",)),
    )(x3, ss, mask, w_mat, bias.reshape(Cout, 1).astype(jnp.float32))

    return out3.reshape(N, Cout, H, W)            # free reshape back to NCHW


# ------------------------------------ Pure-JAX reference -----------------------------------
def reference(x_nchw, gamma, beta, w_oihw, bias):
    mean = jnp.mean(x_nchw, axis=(0, 2, 3), keepdims=True)
    var = jnp.mean((x_nchw - mean) ** 2, axis=(0, 2, 3), keepdims=True)
    y = (x_nchw - mean) * jax.lax.rsqrt(var + EPS)
    y = y * gamma.reshape(1, -1, 1, 1) + beta.reshape(1, -1, 1, 1)
    y = jnp.maximum(y, 0.0)
    out = jax.lax.conv_general_dilated(
        y, w_oihw, window_strides=(1, 1), padding=((1, 1), (1, 1)),
        dimension_numbers=("NCHW", "OIHW", "NCHW"),
        precision=jax.lax.Precision.HIGHEST)
    return out + bias.reshape(1, -1, 1, 1)


if __name__ == "__main__":
    # PreActConvBlock(in_dims=4, out_dims=8, kernel_size=3, stride=1, padding=1)
    # Batch 8 so the auto-picked tile gives nb=2 images/step and a 4-step
    # "parallel" grid (balanced across v7x's 2 TensorCores, pipeline depth > 1).
    N, Cin, H, W = 8, 4, 16, 16
    Cout, KH, KW = 8, 3, 3

    key = jax.random.PRNGKey(0)
    kx, kg, kb, kw, kbias = jax.random.split(key, 5)
    x = jax.random.normal(kx, (N, Cin, H, W), dtype=jnp.float32)
    gamma = 1.0 + 0.1 * jax.random.normal(kg, (Cin,), dtype=jnp.float32)
    beta = 0.1 * jax.random.normal(kb, (Cin,), dtype=jnp.float32)
    w = 0.1 * jax.random.normal(kw, (Cout, Cin, KH, KW), dtype=jnp.float32)
    bias = 0.1 * jax.random.normal(kbias, (Cout,), dtype=jnp.float32)

    ref = jax.block_until_ready(reference(x, gamma, beta, w, bias))

    # fp32 MXU path (tight check vs. XLA reference).
    out = jax.block_until_ready(preact_conv_block(x, gamma, beta, w, bias))
    assert out.shape == (N, Cout, H, W), out.shape
    err = float(jnp.max(jnp.abs(out - ref)))
    assert err < 1e-3, f"fp32 path max abs err {err}"

    # bf16 activations/weights for the im2col + MXU (native v6e/v7x fast path).
    out_bf16 = jax.block_until_ready(
        preact_conv_block(x, gamma, beta, w, bias, compute_dtype=jnp.bfloat16))
    err_bf16 = float(jnp.max(jnp.abs(out_bf16 - ref)))
    assert err_bf16 < 1e-1, f"bf16 path max abs err {err_bf16}"

    print("KERNEL_OK")
</pallas_src>

<mosaic_0001>
module attributes {stable_mosaic.version = 11 : i64} {
  func.func @bn_scale_shift_kernel(%arg0: i32, %arg1: memref<2x4x256xf32, #tpu.memory_space<vmem>>, %arg2: memref<4x1xf32, #tpu.memory_space<vmem>>, %arg3: memref<4x1xf32, #tpu.memory_space<vmem>>, %arg4: memref<4x2xf32, #tpu.memory_space<vmem>>) attributes {dimension_semantics = [#tpu.dimension_semantics<arbitrary>], iteration_bounds = array<i64: 4>, scalar_prefetch = 0 : i64, scratch_operands = 0 : i64, tpu.core_type = #tpu.core_type<tc>, window_params = [{transform_indices = @transform_0, window_bounds = array<i64: 2, 4, 256>}, {pipeline_mode = #tpu.pipeline_mode<synchronous>, transform_indices = @transform_1, window_bounds = array<i64: 4, 1>}, {pipeline_mode = #tpu.pipeline_mode<synchronous>, transform_indices = @transform_2, window_bounds = array<i64: 4, 1>}, {pipeline_mode = #tpu.pipeline_mode<synchronous>, transform_indices = @transform_3, window_bounds = array<i64: 4, 2>}]} {
    %c0_i32 = arith.constant 0 : i32
    %0 = arith.cmpi eq, %arg0, %c0_i32 : i32
    %1 = arith.extui %0 : i1 to i32
    %c0_i32_0 = arith.constant 0 : i32
    %2 = arith.cmpi ne, %1, %c0_i32_0 : i32
    scf.if %2 {
      %cst_15 = arith.constant 0.000000e+00 : f32
      %30 = vector.broadcast %cst_15 : f32 to vector<4x2xf32>
      %c0_16 = arith.constant 0 : index
      %c0_17 = arith.constant 0 : index
      %31 = vector.load %arg4[%c0_16, %c0_17] : memref<4x2xf32, #tpu.memory_space<vmem>>, vector<4x2xf32>
      tpu.vector_store %arg4[%c0_16, %c0_17], %30 {strides = array<i32>} : memref<4x2xf32, #tpu.memory_space<vmem>>, vector<4x2xf32>,
    } else {
    }
    %cst = arith.constant 0.000000e+00 : f32
    %3 = vector.broadcast %cst : f32 to vector<4x1xf32>
    %cst_1 = arith.constant 0.000000e+00 : f32
    %4 = vector.broadcast %cst_1 : f32 to vector<4x1xf32>
    %c0 = arith.constant 0 : index
    %c0_2 = arith.constant 0 : index
    %c0_3 = arith.constant 0 : index
    %5 = vector.load %arg1[%c0, %c0_2, %c0_3] : memref<2x4x256xf32, #tpu.memory_space<vmem>>, vector<1x4x256xf32>
    %6 = vector.shape_cast %5 : vector<1x4x256xf32> to vector<4x256xf32>
    %cst_4 = arith.constant dense<0.000000e+00> : vector<4xf32>
    %7 = vector.multi_reduction <add>, %6, %cst_4 [1] : vector<4x256xf32> to vector<4xf32>
    %8 = vector.shape_cast %7 : vector<4xf32> to vector<4x1xf32>
    %9 = arith.addf %3, %8 : vector<4x1xf32>
    %10 = arith.mulf %6, %6 : vector<4x256xf32>
    %cst_5 = arith.constant dense<0.000000e+00> : vector<4xf32>
    %11 = vector.multi_reduction <add>, %10, %cst_5 [1] : vector<4x256xf32> to vector<4xf32>
    %12 = vector.shape_cast %11 : vector<4xf32> to vector<4x1xf32>
    %13 = arith.addf %4, %12 : vector<4x1xf32>
    %c1 = arith.constant 1 : index
    %c0_6 = arith.constant 0 : index
    %c0_7 = arith.constant 0 : index
    %14 = vector.load %arg1[%c1, %c0_6, %c0_7] : memref<2x4x256xf32, #tpu.memory_space<vmem>>, vector<1x4x256xf32>
    %15 = vector.shape_cast %14 : vector<1x4x256xf32> to vector<4x256xf32>
    %cst_8 = arith.constant dense<0.000000e+00> : vector<4xf32>
    %16 = vector.multi_reduction <add>, %15, %cst_8 [1] : vector<4x256xf32> to vector<4xf32>
    %17 = vector.shape_cast %16 : vector<4xf32> to vector<4x1xf32>
    %18 = arith.addf %9, %17 : vector<4x1xf32>
    %19 = arith.mulf %15, %15 : vector<4x256xf32>
    %cst_9 = arith.constant dense<0.000000e+00> : vector<4xf32>
    %20 = vector.multi_reduction <add>, %19, %cst_9 [1] : vector<4x256xf32> to vector<4xf32>
    %21 = vector.shape_cast %20 : vector<4xf32> to vector<4x1xf32>
    %22 = arith.addf %13, %21 : vector<4x1xf32>
    %c0_10 = arith.constant 0 : index
    %c0_11 = arith.constant 0 : index
    %23 = vector.load %arg4[%c0_10, %c0_11] : memref<4x2xf32, #tpu.memory_space<vmem>>, vector<4x2xf32>
    %24 = tpu.concatenate %18, %22 in 1 : vector<4x1xf32>, vector<4x1xf32> -> vector<4x2xf32>
    %25 = arith.addf %23, %24 : vector<4x2xf32>
    %c0_12 = arith.constant 0 : index
    %c0_13 = arith.constant 0 : index
    %26 = vector.load %arg4[%c0_12, %c0_13] : memref<4x2xf32, #tpu.memory_space<vmem>>, vector<4x2xf32>
    tpu.vector_store %arg4[%c0_12, %c0_13], %25 {strides = array<i32>} : memref<4x2xf32, #tpu.memory_space<vmem>>, vector<4x2xf32>,
    %c3_i32 = arith.constant 3 : i32
    %27 = arith.cmpi eq, %arg0, %c3_i32 : i32
    %28 = arith.extui %27 : i1 to i32
    %c0_i32_14 = arith.constant 0 : i32
    %29 = arith.cmpi ne, %28, %c0_i32_14 : i32
    scf.if %29 {
      %c0_15 = arith.constant 0 : index
      %c0_16 = arith.constant 0 : index
      %30 = vector.load %arg4[%c0_15, %c0_16] : memref<4x2xf32, #tpu.memory_space<vmem>>, vector<4x2xf32>
      %31 = vector.extract_strided_slice %30 {offsets = [0, 0], sizes = [4, 1], strides = [1, 1]} : vector<4x2xf32> to vector<4x1xf32>
      %cst_17 = arith.constant 4.8828125E-4 : f32
      %32 = vector.broadcast %cst_17 : f32 to vector<4x1xf32>
      %33 = arith.mulf %31, %32 : vector<4x1xf32>
      %34 = vector.extract_strided_slice %30 {offsets = [0, 1], sizes = [4, 1], strides = [1, 1]} : vector<4x2xf32> to vector<4x1xf32>
      %cst_18 = arith.constant 4.8828125E-4 : f32
      %35 = vector.broadcast %cst_18 : f32 to vector<4x1xf32>
      %36 = arith.mulf %34, %35 : vector<4x1xf32>
      %37 = arith.mulf %33, %33 : vector<4x1xf32>
      %38 = arith.subf %36, %37 : vector<4x1xf32>
      %c0_19 = arith.constant 0 : index
      %c0_20 = arith.constant 0 : index
      %39 = vector.load %arg2[%c0_19, %c0_20] : memref<4x1xf32, #tpu.memory_space<vmem>>, vector<4x1xf32>
      %cst_21 = arith.constant 9.99999974E-6 : f32
      %40 = vector.broadcast %cst_21 : f32 to vector<4x1xf32>
      %41 = arith.addf %38, %40 : vector<4x1xf32>
      %42 = math.rsqrt %41 : vector<4x1xf32>
      %43 = arith.mulf %39, %42 : vector<4x1xf32>
      %c0_22 = arith.constant 0 : index
      %c0_23 = arith.constant 0 : index
      %44 = vector.load %arg3[%c0_22, %c0_23] : memref<4x1xf32, #tpu.memory_space<vmem>>, vector<4x1xf32>
      %45 = arith.mulf %33, %43 : vector<4x1xf32>
      %46 = arith.subf %44, %45 : vector<4x1xf32>
      %47 = tpu.concatenate %43, %46 in 1 : vector<4x1xf32>, vector<4x1xf32> -> vector<4x2xf32>
      %c0_24 = arith.constant 0 : index
      %c0_25 = arith.constant 0 : index
      %48 = vector.load %arg4[%c0_24, %c0_25] : memref<4x2xf32, #tpu.memory_space<vmem>>, vector<4x2xf32>
      tpu.vector_store %arg4[%c0_24, %c0_25], %47 {strides = array<i32>} : memref<4x2xf32, #tpu.memory_space<vmem>>, vector<4x2xf32>,
    } else {
    }
    return
  }
  func.func @transform_0(%arg0: i32) -> (i32, i32, i32) {
    %c0_i32 = arith.constant 0 : i32
    %c0_i32_0 = arith.constant 0 : i32
    %c0_i32_1 = arith.constant 0 : i32
    return %arg0, %c0_i32, %c0_i32_0 : i32, i32, i32
  }
  func.func @transform_1(%arg0: i32) -> (i32, i32) {
    %c0_i32 = arith.constant 0 : i32
    %c0_i32_0 = arith.constant 0 : i32
    %c0_i32_1 = arith.constant 0 : i32
    return %c0_i32, %c0_i32_0 : i32, i32
  }
  func.func @transform_2(%arg0: i32) -> (i32, i32) {
    %c0_i32 = arith.constant 0 : i32
    %c0_i32_0 = arith.constant 0 : i32
    %c0_i32_1 = arith.constant 0 : i32
    return %c0_i32, %c0_i32_0 : i32, i32
  }
  func.func @transform_3(%arg0: i32) -> (i32, i32) {
    %c0_i32 = arith.constant 0 : i32
    %c0_i32_0 = arith.constant 0 : i32
    %c0_i32_1 = arith.constant 0 : i32
    return %c0_i32, %c0_i32_0 : i32, i32
  }
}

</mosaic_0001>

<llo_original>
// kernel: tpu_custom_call.1
$region0: #{tpu_custom_call.1}
  #allocation0 [shape = 'u32[]', space=smem, size = 0x4, offset = 0x4, fixed_abs, tag = 'smem constant byte address 0x4 - core index']
  #allocation1 [shape = 'u32[144,128]{1,0:T(1,128)}', space=vmem, size = 0x12000, scoped, tag = 'internal scratch']
  %s0 = inlined_call_operand.hbm [shape: f32[8,4,256], index: 0, kind: input, shape index: {}]
  %s1 = inlined_call_operand.vmem [shape: f32[4,1], index: 1, kind: input, shape index: {}]
  %s2 = inlined_call_operand.vmem [shape: f32[4,1], index: 2, kind: input, shape index: {}]
  %s3 = inlined_call_operand.vmem [shape: f32[4,2], index: 3, kind: output, shape index: {}]
  %s4 = sld [smem:[#allocation0]]
  $region57: #{tpu_custom_call.1} parent=0
    _
  %s6 = ssub.s32 1, %s4
  %s7 = scalar_select 0, %s6, %s4
  $region1: #{tpu_custom_call.1} parent=0
    #allocation2 [shape = 'u8[16384]{0}', space=vmem, size = 0x4000, scoped, tag = 'input window, operand 0']
    #allocation3 [shape = 's32[2]{0}', space=sflag, size = 0x8, scoped, tag = 'scoped memory for tpu_custom_call.1']
    %8 = vsyncpa [#allocation3], 0
    %s9 = scalar_lea.sflag [#allocation3], 1
    %10 = vsyncpa %s9, 0
    loop: start=0, step=1, limit=6
    $region2: #{tpu_custom_call.1} parent=1 // loop_pre_header
      _
    $region3: #{tpu_custom_call.1} parent=1 // loop_header
      %s12 = sphi 0, %s16
      %p13 = scmp.ge.s32.totalorder %s12, 6
      %s22 = sphi 0, %s24
      %s25 = sphi 0, %s22
      %s26 = sphi 0, %s25
      %s42 = sphi 0, %s26
      %s46 = sphi 0, %s46
      %s48 = sphi 0, %s46
      %s49 = sphi 0, %s48
      %s63 = sphi 0, %s49
      %s67 = sphi 0, %s67
      %s69 = sphi 0, %s67
      %s70 = sphi 0, %s69
      %s84 = sphi 0, %s70
      %s88 = sphi 0, %s88
      %s90 = sphi 0, %s88
      %s91 = sphi 0, %s90
      %s105 = sphi 0, %s91
    $region4: #{tpu_custom_call.1} parent=1 // loop_header_branch
      %15 = sbr.rel (%p13) target = $region8
    $region5: #{tpu_custom_call.1} parent=1 // loop_body
      %s17 = ssub.s32 %s12, 1
      %s18 = ssub.s32 %s12, 2
      %s19 = sadd.s32 %s12, 1
      %s20 = ssub.s32 %s12, %s19
      %p21 = scmp.eq.s32.totalorder %s20, 0
      %s23 = sadd.s32 %s22, 1
      %s24 = scalar_select %p21, %s22, %s23
      %p27 = pneg %p21
      %p28 = scmp.eq.s32.totalorder %s12, 3
      %p29 = por %p27, %p28
      %p30 = scmp.ne.s32.totalorder %s22, %s25
      %p31 = scmp.eq.s32.totalorder %s12, 0
      %p32 = por %p30, %p31
      %p33 = scmp.ne.s32.totalorder %s22, %s25
      %p34 = scmp.eq.s32.totalorder %s17, 3
      %p35 = por %p33, %p34
      %p36 = scmp.ne.s32.totalorder %s25, %s26
      %p37 = scmp.eq.s32.totalorder %s17, 0
      %p38 = por %p36, %p37
      %p39 = scmp.ne.s32.totalorder %s25, %s26
      %p40 = scmp.eq.s32.totalorder %s18, 3
      %p41 = por %p39, %p40
      %p43 = scmp.ne.s32.totalorder %s26, %s42
      %p44 = scmp.eq.s32.totalorder %s18, 0
      %p45 = por %p43, %p44
      %s47 = sadd.s32 %s46, 1
      %p50 = scmp.eq.s32.totalorder %s12, 3
      %p51 = scmp.ne.s32.totalorder %s46, %s48
      %p52 = scmp.eq.s32.totalorder %s12, 0
      %p53 = por %p51, %p52
      %p54 = scmp.ne.s32.totalorder %s46, %s48
      %p55 = scmp.eq.s32.totalorder %s17, 3
      %p56 = por %p54, %p55
      %p57 = scmp.ne.s32.totalorder %s48, %s49
      %p58 = scmp.eq.s32.totalorder %s17, 0
      %p59 = por %p57, %p58
      %p60 = scmp.ne.s32.totalorder %s48, %s49
      %p61 = scmp.eq.s32.totalorder %s18, 3
      %p62 = por %p60, %p61
      %p64 = scmp.ne.s32.totalorder %s49, %s63
      %p65 = scmp.eq.s32.totalorder %s18, 0
      %p66 = por %p64, %p65
      %s68 = sadd.s32 %s67, 1
      %p71 = scmp.eq.s32.totalorder %s12, 3
      %p72 = scmp.ne.s32.totalorder %s67, %s69
      %p73 = scmp.eq.s32.totalorder %s12, 0
      %p74 = por %p72, %p73
      %p75 = scmp.ne.s32.totalorder %s67, %s69
      %p76 = scmp.eq.s32.totalorder %s17, 3
      %p77 = por %p75, %p76
      %p78 = scmp.ne.s32.totalorder %s69, %s70
      %p79 = scmp.eq.s32.totalorder %s17, 0
      %p80 = por %p78, %p79
      %p81 = scmp.ne.s32.totalorder %s69, %s70
      %p82 = scmp.eq.s32.totalorder %s18, 3
      %p83 = por %p81, %p82
      %p85 = scmp.ne.s32.totalorder %s70, %s84
      %p86 = scmp.eq.s32.totalorder %s18, 0
      %p87 = por %p85, %p86
      %s89 = sadd.s32 %s88, 1
      %p92 = scmp.eq.s32.totalorder %s12, 3
      %p93 = scmp.ne.s32.totalorder %s88, %s90
      %p94 = scmp.eq.s32.totalorder %s12, 0
      %p95 = por %p93, %p94
      %p96 = scmp.ne.s32.totalorder %s88, %s90
      %p97 = scmp.eq.s32.totalorder %s17, 3
      %p98 = por %p96, %p97
      %p99 = scmp.ne.s32.totalorder %s90, %s91
      %p100 = scmp.eq.s32.totalorder %s17, 0
      %p101 = por %p99, %p100
      %p102 = scmp.ne.s32.totalorder %s90, %s91
      %p103 = scmp.eq.s32.totalorder %s18, 3
      %p104 = por %p102, %p103
      %p106 = scmp.ne.s32.totalorder %s91, %s105
      %p107 = scmp.eq.s32.totalorder %s18, 0
      %p108 = por %p106, %p107
      %p109 = scmp.le.s32.totalorder 1, %s12
      %p110 = scmp.lt.s32.totalorder %s12, 5
      %p111 = pnand %p109, %p110
      %p112 = pneg %p111
      // Predicated region
      $region9: #{tpu_custom_call.1} parent=5 // pred_check
        _
      $region10: #{tpu_custom_call.1} parent=5 // pred_check_branch
        %114 = sbr.rel (%p111) target = $region12
      $region11: #{tpu_custom_call.1} parent=5 // pred_region
        %s115 = ssub.s32 %s12, 1
        // Predicated region
        $region13: #{tpu_custom_call.1} parent=11 // pred_check
          %p116 = pneg %p59
        $region14: #{tpu_custom_call.1} parent=11 // pred_check_branch
          %118 = sbr.rel (%p116) target = $region16
        $region15: #{tpu_custom_call.1} parent=11 // pred_region
          _
        $region16: #{tpu_custom_call.1} parent=11 // pred_fallthru
          _
        // Predicated region
        $region17: #{tpu_custom_call.1} parent=11 // pred_check
          %p119 = pneg %p80
        $region18: #{tpu_custom_call.1} parent=11 // pred_check_branch
          %121 = sbr.rel (%p119) target = $region20
        $region19: #{tpu_custom_call.1} parent=11 // pred_region
          _
        $region20: #{tpu_custom_call.1} parent=11 // pred_fallthru
          _
      $region12: #{tpu_custom_call.1} parent=5 // pred_fallthru
        _
      %p122 = scmp.lt.s32.totalorder %s12, 4
      // Predicated region
      $region21: #{tpu_custom_call.1} parent=5 // pred_check
        %p123 = pneg %p122
      $region22: #{tpu_custom_call.1} parent=5 // pred_check_branch
        %125 = sbr.rel (%p123) target = $region24
      $region23: #{tpu_custom_call.1} parent=5 // pred_region
        // Predicated region
        $region25: #{tpu_custom_call.1} parent=23 // pred_check
          %p126 = pneg %p32
        $region26: #{tpu_custom_call.1} parent=23 // pred_check_branch
          %128 = sbr.rel (%p126) target = $region28
        $region27: #{tpu_custom_call.1} parent=23 // pred_region
          %s129 = sand.u32 %s22, 1
          %s130 = scalar_lea.sflag [#allocation3], %s129
          %s131 = sand.u32 %s22, 1
          %s132 = smul.addr %s131, 16
          %s133 = scalar_lea.vmem [#allocation2], %s132
          %s134 = smul.u32 2, %s12
          %s136 = ssub.s32 256, 256
          %137 = vsyncadd %s130, %s136
          %s138 = smul.addr %s134, 2
          %s139 = smul.addr %s138, 64
          %s140 = scalar_lea.hbm %s0, %s139
          %s141 = sshll.u32 %s133, 4
          %s142 = int_to_ptr.vmem [resolvable:$true] %s141
          %147 = dma.hbm_to_vmem [thread:$0]  %s140, 256, %s142, %s130, 128, 128, 8
        $region28: #{tpu_custom_call.1} parent=23 // pred_fallthru
          _
      $region24: #{tpu_custom_call.1} parent=5 // pred_fallthru
        _
      %p148 = scmp.le.s32.totalorder 1, %s12
      %p149 = scmp.lt.s32.totalorder %s12, 5
      %p150 = pnand %p148, %p149
      %p151 = pneg %p150
      // Predicated region
      $region29: #{tpu_custom_call.1} parent=5 // pred_check
        _
      $region30: #{tpu_custom_call.1} parent=5 // pred_check_branch
        %153 = sbr.rel (%p150) target = $region32
      $region31: #{tpu_custom_call.1} parent=5 // pred_region
        %s154 = ssub.s32 %s12, 1
        %s155 = sand.u32 %s25, 1
        %s156 = scalar_lea.sflag [#allocation3], %s155
        %s157 = sand.u32 %s25, 1
        %s158 = smul.addr %s157, 16
        %s159 = scalar_lea.vmem [#allocation2], %s158
        // Predicated region
        $region33: #{tpu_custom_call.1} parent=31 // pred_check
          %p160 = pneg %p38
        $region34: #{tpu_custom_call.1} parent=31 // pred_check_branch
          %162 = sbr.rel (%p160) target = $region36
        $region35: #{tpu_custom_call.1} parent=31 // pred_region
          %163 = dma.done %s156, 256
        $region36: #{tpu_custom_call.1} parent=31 // pred_fallthru
          _
        %s164 = sand.u32 %s25, 1
        %s165 = scalar_lea.sflag [#allocation3], %s164
        %s166 = sand.u32 %s25, 1
        %s167 = smul.addr %s166, 16
        %s168 = scalar_lea.vmem [#allocation2], %s167
        %p169 = pneg %p38
        %p170 = pneg %p35
        %p171 = pneg %p59
        %p172 = pneg %p56
        %p173 = pneg %p80
        %p174 = pneg %p77
        %p175 = pneg %p101
        %p176 = pneg %p98
        %s177 = smul.u32 2, %s17
        %p178 = scmp.eq.s32.totalorder %s17, 0
        // Predicated region
        $region37: #{tpu_custom_call.1} parent=31 // pred_check
          %p179 = pneg %p178
        $region38: #{tpu_custom_call.1} parent=31 // pred_check_branch
          %181 = sbr.rel (%p179) target = $region40
        $region39: #{tpu_custom_call.1} parent=31 // pred_region
          %vm182 = vcmask 11264
          %183 = vst.msk [vmem:[%s3] sm:$0xf] %vm182, 0.0
        $region40: #{tpu_custom_call.1} parent=31 // pred_fallthru
          _
        %v184 = vld [vmem:[%s159] sm:$0xff]
        %v186 = vcombine.high %v184, %v184
        %vm188 = vcmask 1043456
        %v189 = vsel %vm188, %v184, 0.0
        %v190 = vsel %vm188, %v186, 0.0
        %v191 = vadd.f32 %v189, %v190
        %192 = vadd.xlane.f32.xlu0 %v191
        %v193 = vpop.xlane.xlu0 %192
        %v194 = vadd.f32 %v193, 0.0
        %v195 = vmul.f32 %v184, %v184
        %v197 = vcombine.high %v195, %v195
        %v199 = vsel %vm188, %v195, 0.0
        %v200 = vsel %vm188, %v197, 0.0
        %v201 = vadd.f32 %v199, %v200
        %202 = vadd.xlane.f32.xlu0 %v201
        %v203 = vpop.xlane.xlu0 %202
        %v204 = vadd.f32 %v203, 0.0
        %s205 = scalar_lea.vmem %s159, 8 [#allocation2]
        %v206 = vld [vmem:[%s205] sm:$0xff]
        %v208 = vcombine.high %v206, %v206
        %v210 = vsel %vm188, %v206, 0.0
        %v211 = vsel %vm188, %v208, 0.0
        %v212 = vadd.f32 %v210, %v211
        %213 = vadd.xlane.f32.xlu0 %v212
        %v214 = vpop.xlane.xlu0 %213
        %v215 = vadd.f32 %v194, %v214
        %v216 = vmul.f32 %v206, %v206
        %v218 = vcombine.high %v216, %v216
        %v220 = vsel %vm188, %v216, 0.0
        %v221 = vsel %vm188, %v218, 0.0
        %v222 = vadd.f32 %v220, %v221
        %223 = vadd.xlane.f32.xlu0 %v222
        %v224 = vpop.xlane.xlu0 %223
        %v225 = vadd.f32 %v204, %v224
        %v226 = vld [vmem:[%s3] sm:$0xf]
        %vm227 = vcmask 7168
        %v228 = vsel %vm227, %v215, %v225
        %v229 = vadd.f32 %v226, %v228
        %vm230 = vcmask 11264
        %231 = vst.msk [vmem:[%s3] sm:$0xf] %vm230, %v229
        %p232 = scmp.eq.s32.totalorder %s17, 3
        // Predicated region
        $region41: #{tpu_custom_call.1} parent=31 // pred_check
          %p233 = pneg %p232
        $region42: #{tpu_custom_call.1} parent=31 // pred_check_branch
          %235 = sbr.rel (%p233) target = $region44
        $region43: #{tpu_custom_call.1} parent=31 // pred_region
          %v236 = vld [vmem:[%s3] sm:$0xf]
          %v237 = vmul.f32 %v236, 0.00048828125
          %v238 = vmul.f32 %v237, %v237
          %240 = vrot.lane.b32.xlu0 %v238, 1
          %v241 = vpop.permute.xlu0 %240
          %v243 = vsub.f32 %v237, %v241
          %v244 = vld [vmem:[%s1] sm:$0xf]
          %v245 = vadd.f32 %v243, 1e-05
          %v246 = vrsqrt.pop %v245
          %248 = vrot.lane.b32.xlu0 %v246, 127
          %v249 = vpop.permute.xlu0 %248
          %v251 = vmul.f32 %v244, %v249
          %v252 = vld [vmem:[%s2] sm:$0xf]
          %v253 = vmul.f32 %v237, %v251
          %v254 = vsub.f32 %v252, %v253
          %256 = vrot.lane.b32.xlu0 %v254, 1
          %v257 = vpop.permute.xlu0 %256
          %v259 = vsel %vm227, %v251, %v257
          %260 = vst.msk [vmem:[%s3] sm:$0xf] %vm230, %v259
        $region44: #{tpu_custom_call.1} parent=31 // pred_fallthru
          _
        // Predicated region
        $region45: #{tpu_custom_call.1} parent=31 // pred_check
          %p261 = pneg %p98
        $region46: #{tpu_custom_call.1} parent=31 // pred_check_branch
          %263 = sbr.rel (%p261) target = $region48
        $region47: #{tpu_custom_call.1} parent=31 // pred_region
          _
        $region48: #{tpu_custom_call.1} parent=31 // pred_fallthru
          _
        // Predicated region
        $region49: #{tpu_custom_call.1} parent=31 // pred_check
          %p264 = pneg %p98
        $region50: #{tpu_custom_call.1} parent=31 // pred_check_branch
          %266 = sbr.rel (%p264) target = $region52
        $region51: #{tpu_custom_call.1} parent=31 // pred_region
          _
        $region52: #{tpu_custom_call.1} parent=31 // pred_fallthru
          _
      $region32: #{tpu_custom_call.1} parent=5 // pred_fallthru
        _
      %p267 = scmp.le.s32.totalorder 2, %s12
      // Predicated region
      $region53: #{tpu_custom_call.1} parent=5 // pred_check
        %p268 = pneg %p267
      $region54: #{tpu_custom_call.1} parent=5 // pred_check_branch
        %270 = sbr.rel (%p268) target = $region56
      $region55: #{tpu_custom_call.1} parent=5 // pred_region
        %s271 = ssub.s32 %s12, 2
      $region56: #{tpu_custom_call.1} parent=5 // pred_fallthru
        _
    $region6: #{tpu_custom_call.1} parent=1 // loop_footer
      %s16 = sadd.s32 1, %s12
    $region7: #{tpu_custom_call.1} parent=1 // loop_footer_branch
      %11 = sbr.rel target = $region3
    $region8: #{tpu_custom_call.1} parent=1 // loop_exit
      _
    %272 = vsyncpa [#allocation3], 1
    %s273 = scalar_lea.sflag [#allocation3], 1
    %274 = vsyncpa %s273, 1

</llo_original>
